<compile_context>
chip_gen: v7x
topology: tpu7x:2x2x1
jax: 0.10.0
libtpu: 0.0.40
codegen_flags: <defaults>
</compile_context>

<pallas_src>
import jax
import jax.numpy as jnp
from jax.experimental import pallas as pl
from jax.experimental.pallas import tpu as pltpu


# ----------------------------------------------------------------------------
# Hardware sizing helpers
# ----------------------------------------------------------------------------
def _vmem_budget_and_limit():
    """(working-set budget, vmem_limit_bytes) sized from the chip's VMEM."""
    try:
        cap = int(pltpu.get_tpu_info().vmem_capacity_bytes)
    except Exception:
        cap = 64 * 1024 * 1024  # conservative default (fits every generation)
    limit = min((cap * 3) // 4, 100 * 1024 * 1024)   # v7x -> 48 MiB, v5e/v6e -> 96 MiB
    budget = (limit * 3) // 4                        # headroom for compiler scratch
    return budget, limit


def _num_tensorcores():
    """Best-effort TensorCore count per chip (2 on v7x, else 1)."""
    try:
        dev = jax.devices()[0]
        n = getattr(dev, "num_cores", None)
        if n is not None and int(n) > 0:
            return int(n)
        if "v7" in str(getattr(dev, "device_kind", "")).lower():
            return 2
    except Exception:
        pass
    return 1


def _adjust_for_cores(tn, H, num_cores):
    """On multi-TC chips prefer an even column-block count for a balanced split."""
    if num_cores <= 1:
        return tn
    h128 = pl.cdiv(H, 128) * 128
    if h128 <= 128:
        return tn                      # only one 128-lane column; nothing to balance
    nblk = pl.cdiv(h128, tn)
    if nblk % 2 == 0:
        return tn
    target = nblk + 1                  # next even block count
    new_tn = pl.cdiv(pl.cdiv(h128, target), 128) * 128
    if new_tn >= 128 and pl.cdiv(h128, new_tn) % 2 == 0:
        return new_tn
    return tn


def _pick_lane_tile_full(S, H, itemsize, budget, num_cores):
    """Lane tile for the full-S-block path; 0 if it cannot fit the VMEM budget."""
    temps = 1 if itemsize >= 4 else 2          # f32 temps held live in the kernel
    per_col = S * (4 * itemsize + temps * 4)   # 2 in + 2 out pipeline bufs + temps
    h128 = pl.cdiv(H, 128) * 128
    max_tn = min((budget // per_col) // 128 * 128, h128)
    if max_tn < 128:
        return 0
    tn = max_tn
    # Prefer >= 4 column blocks when the tile can stay >= 512 lanes (pipeline overlap).
    quarter = (h128 // 4) // 128 * 128
    if quarter >= 512 and quarter < tn:
        tn = quarter
    return _adjust_for_cores(tn, H, num_cores)


# ----------------------------------------------------------------------------
# Path 1: whole reduction axis in one block (small / medium S)
# ----------------------------------------------------------------------------
def _softmax_full_kernel(x_ref, o_ref):
    x = x_ref[...]
    if x.dtype != jnp.float32:
        x = x.astype(jnp.float32)                        # f32 accumulation
    x_max = jnp.max(x, axis=0, keepdims=True)            # (1, tn)
    x_exp = jnp.exp(x - x_max)                           # (S, tn)  -- EUP
    partition = jnp.sum(x_exp, axis=0, keepdims=True)    # (1, tn)
    inv = pl.reciprocal(partition, approx=False)         # 1 recip/col + VPU multiply
    o_ref[...] = (x_exp * inv).astype(o_ref.dtype)


def _softmax_full(x, tn, vmem_limit):
    S, H = x.shape
    grid = (pl.cdiv(H, tn),)
    cost = pl.CostEstimate(
        flops=4 * S * H,
        transcendentals=S * H,
        bytes_accessed=2 * S * H * x.dtype.itemsize,
    )
    return pl.pallas_call(
        _softmax_full_kernel,
        out_shape=jax.ShapeDtypeStruct((S, H), x.dtype),
        grid=grid,
        in_specs=[pl.BlockSpec((S, tn), lambda j: (0, j))],
        out_specs=pl.BlockSpec((S, tn), lambda j: (0, j)),
        compiler_params=pltpu.CompilerParams(
            dimension_semantics=("parallel",),
            vmem_limit_bytes=vmem_limit,
        ),
        cost_estimate=cost,
    )(x)


# ----------------------------------------------------------------------------
# Path 2: online (two-pass) softmax for large S
# ----------------------------------------------------------------------------
def _make_stats_kernel(S, ts):
    needs_mask = (S % ts) != 0

    def stats_kernel(x_ref, m_out_ref, l_out_ref, m_sc, l_sc):
        i = pl.program_id(1)

        @pl.when(i == 0)
        def _():
            m_sc[...] = jnp.full_like(m_sc, -jnp.inf)
            l_sc[...] = jnp.zeros_like(l_sc)

        x = x_ref[...].astype(jnp.float32)
        if needs_mask:
            # Last S-chunk may run past the array; mask those rows to -inf so
            # they contribute nothing to max or sum.
            row = i * ts + jax.lax.broadcasted_iota(jnp.int32, x.shape, 0)
            x = jnp.where(row < S, x, -jnp.inf)

        chunk_max = jnp.max(x, axis=0, keepdims=True)
        m_new = jnp.maximum(m_sc[...], chunk_max)
        l_sc[...] = l_sc[...] * jnp.exp(m_sc[...] - m_new) + jnp.sum(
            jnp.exp(x - m_new), axis=0, keepdims=True)
        m_sc[...] = m_new

        @pl.when(i == pl.num_programs(1) - 1)
        def _():
            m_out_ref[...] = m_sc[...]
            l_out_ref[...] = l_sc[...]

    return stats_kernel


def _normalize_kernel(x_ref, m_ref, l_ref, o_ref):
    x = x_ref[...].astype(jnp.float32)
    e = jnp.exp(x - m_ref[...])
    inv = pl.reciprocal(l_ref[...], approx=False)
    o_ref[...] = (e * inv).astype(o_ref.dtype)


def _softmax_chunked(x, budget, vmem_limit, cores, ts=None, tn=None):
    S, H = x.shape
    itemsize = x.dtype.itemsize
    h128 = pl.cdiv(H, 128) * 128

    if tn is None:
        tn = _adjust_for_cores(min(512, h128), H, cores)
    if ts is None:
        per_elem = 4 * itemsize + 2 * 4          # 2 in + 2 out bufs + ~2 f32 temps
        ts = max(8, (budget // (tn * per_elem) // 8) * 8)
        ts = min(ts, pl.cdiv(S, 8) * 8)

    n_c = pl.cdiv(H, tn)
    n_s = pl.cdiv(S, ts)

    # Pass 1: per-column running max + rescaled running sum (flash-softmax).
    m, l = pl.pallas_call(
        _make_stats_kernel(S, ts),
        out_shape=(jax.ShapeDtypeStruct((1, H), jnp.float32),
                   jax.ShapeDtypeStruct((1, H), jnp.float32)),
        grid=(n_c, n_s),
        in_specs=[pl.BlockSpec((ts, tn), lambda j, i: (i, j))],
        out_specs=(pl.BlockSpec((1, tn), lambda j, i: (0, j)),
                   pl.BlockSpec((1, tn), lambda j, i: (0, j))),
        scratch_shapes=[pltpu.VMEM((1, tn), jnp.float32),
                        pltpu.VMEM((1, tn), jnp.float32)],
        compiler_params=pltpu.CompilerParams(
            dimension_semantics=("parallel", "arbitrary"),
            vmem_limit_bytes=vmem_limit,
        ),
        cost_estimate=pl.CostEstimate(
            flops=3 * S * H,
            transcendentals=S * H,
            bytes_accessed=S * H * itemsize + 8 * H,
        ),
    )(x)

    # Pass 2: normalize and write the full output.
    return pl.pallas_call(
        _normalize_kernel,
        out_shape=jax.ShapeDtypeStruct((S, H), x.dtype),
        grid=(n_c, n_s),
        in_specs=[pl.BlockSpec((ts, tn), lambda j, i: (i, j)),
                  pl.BlockSpec((1, tn), lambda j, i: (0, j)),
                  pl.BlockSpec((1, tn), lambda j, i: (0, j))],
        out_specs=pl.BlockSpec((ts, tn), lambda j, i: (i, j)),
        compiler_params=pltpu.CompilerParams(
            dimension_semantics=("parallel", "parallel"),
            vmem_limit_bytes=vmem_limit,
        ),
        cost_estimate=pl.CostEstimate(
            flops=2 * S * H,
            transcendentals=S * H,
            bytes_accessed=2 * S * H * itemsize + 8 * H,
        ),
    )(x, m, l)


# ----------------------------------------------------------------------------
# Public wrapper
# ----------------------------------------------------------------------------
def softmax_stable(x):
    """Pallas equivalent of PyTorch SoftmaxStable.forward (softmax over dim=0)."""
    orig_shape = x.shape
    if x.ndim == 1:
        x2 = x.reshape(-1, 1)
    elif x.ndim == 2:
        x2 = x
    else:
        x2 = x.reshape(x.shape[0], -1)   # dims 1.. are independent under dim=0 softmax

    S, H = x2.shape
    budget, limit = _vmem_budget_and_limit()
    cores = _num_tensorcores()
    h128 = pl.cdiv(H, 128) * 128

    tn_full = _pick_lane_tile_full(S, H, x2.dtype.itemsize, budget, cores)
    if tn_full >= min(256, h128):
        out = _softmax_full(x2, tn_full, limit)
    else:
        # Full-S blocks either do not fit VMEM or would clamp the lane tile to
        # 128 (~30% of HBM roofline); stream the reduction axis instead.
        out = _softmax_chunked(x2, budget, limit, cores)
    return out.reshape(orig_shape)


if __name__ == "__main__":
    key_a, key_b = jax.random.split(jax.random.PRNGKey(0))

    # Small shape consistent with the module: seq=8, hidden=32, softmax over dim=0.
    x = jax.random.normal(key_a, (8, 32), dtype=jnp.float32)
    out = jax.block_until_ready(softmax_stable(x))

    x_max = jnp.max(x, axis=0, keepdims=True)
    x_exp = jnp.exp(x - x_max)
    ref = x_exp / jnp.sum(x_exp, axis=0, keepdims=True)

    assert out.shape == x.shape and out.dtype == x.dtype
    assert jnp.allclose(out, ref, atol=1e-5, rtol=1e-5)
    assert jnp.allclose(jnp.sum(out, axis=0), jnp.ones((x.shape[1],)), atol=1e-5)

    # Exercise the large-S online/two-pass fallback on a small shape by forcing
    # chunk tiles (ts=16 < S, plus boundary rows AND boundary columns).
    xb = jax.random.normal(key_b, (40, 160), dtype=jnp.float32)
    outb = jax.block_until_ready(
        _softmax_chunked(xb, budget=1 << 20, vmem_limit=32 << 20, cores=1, ts=16, tn=256))
    xb_max = jnp.max(xb, axis=0, keepdims=True)
    xb_exp = jnp.exp(xb - xb_max)
    refb = xb_exp / jnp.sum(xb_exp, axis=0, keepdims=True)
    assert outb.shape == xb.shape and outb.dtype == xb.dtype
    assert jnp.allclose(outb, refb, atol=1e-5, rtol=1e-5)

    print("KERNEL_OK")
</pallas_src>

<mosaic_0001>
module attributes {stable_mosaic.version = 11 : i64} {
  func.func @_softmax_full_kernel(%arg0: i32, %arg1: memref<8x128xf32, #tpu.memory_space<vmem>>, %arg2: memref<8x128xf32, #tpu.memory_space<vmem>>) attributes {dimension_semantics = [#tpu.dimension_semantics<parallel>], iteration_bounds = array<i64: 1>, scalar_prefetch = 0 : i64, scratch_operands = 0 : i64, tpu.core_type = #tpu.core_type<tc>, window_params = [{transform_indices = @transform_0, window_bounds = array<i64: 8, 128>}, {transform_indices = @transform_1, window_bounds = array<i64: 8, 128>}]} {
    %c0 = arith.constant 0 : index
    %c0_0 = arith.constant 0 : index
    %0 = vector.load %arg1[%c0, %c0_0] : memref<8x128xf32, #tpu.memory_space<vmem>>, vector<8x128xf32>
    %cst = arith.constant dense<0xFF800000> : vector<128xf32>
    %1 = vector.multi_reduction <maximumf>, %0, %cst [0] : vector<8x128xf32> to vector<128xf32>
    %2 = vector.shape_cast %1 : vector<128xf32> to vector<1x128xf32>
    %3 = vector.broadcast %2 : vector<1x128xf32> to vector<8x128xf32>
    %4 = arith.subf %0, %3 : vector<8x128xf32>
    %5 = math.exp %4 : vector<8x128xf32>
    %cst_1 = arith.constant dense<0.000000e+00> : vector<128xf32>
    %6 = vector.multi_reduction <add>, %5, %cst_1 [0] : vector<8x128xf32> to vector<128xf32>
    %7 = vector.shape_cast %6 : vector<128xf32> to vector<1x128xf32>
    %8 = tpu.reciprocal %7 : vector<1x128xf32> -> vector<1x128xf32>
    %9 = vector.broadcast %8 : vector<1x128xf32> to vector<8x128xf32>
    %10 = arith.mulf %5, %9 : vector<8x128xf32>
    %c0_2 = arith.constant 0 : index
    %c0_3 = arith.constant 0 : index
    %11 = vector.load %arg2[%c0_2, %c0_3] : memref<8x128xf32, #tpu.memory_space<vmem>>, vector<8x128xf32>
    tpu.vector_store %arg2[%c0_2, %c0_3], %10 {strides = array<i32>} : memref<8x128xf32, #tpu.memory_space<vmem>>, vector<8x128xf32>,
    return
  }
  func.func @transform_0(%arg0: i32) -> (i32, i32) {
    %c0_i32 = arith.constant 0 : i32
    %c0_i32_0 = arith.constant 0 : i32
    return %c0_i32, %arg0 : i32, i32
  }
  func.func @transform_1(%arg0: i32) -> (i32, i32) {
    %c0_i32 = arith.constant 0 : i32
    %c0_i32_0 = arith.constant 0 : i32
    return %c0_i32, %arg0 : i32, i32
  }
}

</mosaic_0001>

<llo_original>
// kernel: tpu_custom_call.1
$region0: #{tpu_custom_call.1}
  #allocation0 [shape = 'u32[]', space=smem, size = 0x4, offset = 0x4, fixed_abs, tag = 'smem constant byte address 0x4 - core index']
  #allocation1 [shape = 'u32[144,128]{1,0:T(1,128)}', space=vmem, size = 0x12000, scoped, tag = 'internal scratch']
  %s0 = inlined_call_operand.hbm [shape: f32[8,32], index: 0, kind: input, shape index: {}]
  %s1 = inlined_call_operand.hbm [shape: f32[8,32], index: 1, kind: output, shape index: {}]
  %s2 = sld [smem:[#allocation0]]
  $region18: #{tpu_custom_call.1} parent=0
    _
  %s4 = ssub.s32 1, %s2
  %s5 = scalar_select 0, %s4, %s2
  $region1: #{tpu_custom_call.1} parent=0
    #allocation2 [shape = 'u8[4096]{0}', space=vmem, size = 0x1000, scoped, tag = 'input window, operand 0, single buffered']
    #allocation3 [shape = 's32[1]{0}', space=sflag, size = 0x4, scoped, tag = 'scoped memory for tpu_custom_call.1']
    #allocation4 [shape = 's32[1]{0}', space=sflag, size = 0x4, scoped, tag = 'scoped memory for tpu_custom_call.1']
    #allocation5 [shape = 'u8[4096]{0}', space=vmem, size = 0x1000, scoped, tag = 'output window, operand 0, single buffered']
    %6 = vsyncpa [#allocation3], 0
    %7 = vsyncpa [#allocation4], 0
    // Predicated region
    $region2: #{tpu_custom_call.1} parent=1 // pred_check
      _
    $region3: #{tpu_custom_call.1} parent=1 // pred_check_branch
      %9 = sbr.rel (0) target = $region5
    $region4: #{tpu_custom_call.1} parent=1 // pred_region
      %s11 = ssub.s32 128, 128
      %12 = vsyncadd [#allocation3], %s11
      %s14 = sshll.u32 [#allocation2], 4
      %s15 = int_to_ptr.vmem [resolvable:$true] %s14
      %17 = dma.hbm_to_vmem [thread:$0]  %s0, 128, %s15, [#allocation3]
    $region5: #{tpu_custom_call.1} parent=1 // pred_fallthru
      _
    // Predicated region
    $region6: #{tpu_custom_call.1} parent=1 // pred_check
      _
    $region7: #{tpu_custom_call.1} parent=1 // pred_check_branch
      %19 = sbr.rel (0) target = $region9
    $region8: #{tpu_custom_call.1} parent=1 // pred_region
      %20 = dma.done [#allocation3], 128
    $region9: #{tpu_custom_call.1} parent=1 // pred_fallthru
      _
    %v21 = vld [vmem:[#allocation2] sm:$0xff]
    %v22 = vrot.slane %v21, 4
    %v23 = vmax.f32 %v21, %v22
    %v24 = vrot.slane %v23, 2
    %v25 = vmax.f32 %v23, %v24
    %v26 = vrot.slane %v25, 1
    %v27 = vmax.f32 %v25, %v26
    %v28 = vsub.f32 %v21, %v27
    %v29 = vmul.f32 %v28, 1.442695
    %v30 = vpow.pop %v29
    %v31 = vrot.slane %v30, 4
    %v32 = vadd.f32 %v30, %v31
    %v33 = vrot.slane %v32, 2
    %v34 = vadd.f32 %v32, %v33
    %v35 = vrot.slane %v34, 1
    %v36 = vadd.f32 %v34, %v35
    %v37 = vrcp.pop %v36
    %v38 = vmul.f32 %v30, %v37
    %39 = vst [vmem:[#allocation5] sm:$0xff] %v38
    // Predicated region
    $region10: #{tpu_custom_call.1} parent=1 // pred_check
      _
    $region11: #{tpu_custom_call.1} parent=1 // pred_check_branch
      %41 = sbr.rel (0) target = $region13
    $region12: #{tpu_custom_call.1} parent=1 // pred_region
      %s43 = ssub.s32 128, 128
      %44 = vsyncadd [#allocation4], %s43
      %s46 = sshll.u32 [#allocation5], 4
      %s47 = int_to_ptr.vmem [resolvable:$true] %s46
      %49 = dma.vmem_to_hbm [thread:$0]  %s47, 128, %s1, [#allocation4]
    $region13: #{tpu_custom_call.1} parent=1 // pred_fallthru
      _
    // Predicated region
    $region14: #{tpu_custom_call.1} parent=1 // pred_check
      _
    $region15: #{tpu_custom_call.1} parent=1 // pred_check_branch
      %51 = sbr.rel (0) target = $region17
    $region16: #{tpu_custom_call.1} parent=1 // pred_region
      %52 = dma.done [#allocation4], 128
    $region17: #{tpu_custom_call.1} parent=1 // pred_fallthru
      _
    %53 = vsyncpa [#allocation3], 1
    %54 = vsyncpa [#allocation4], 1

</llo_original>
